<compile_context>
chip_gen: v5e
topology: v5e:2x2
jax: 0.10.0
libtpu: 0.0.40
codegen_flags: <defaults>
</compile_context>

<pallas_src>
import jax
import jax.numpy as jnp
from jax.experimental import pallas as pl
from jax.experimental.pallas import tpu as pltpu


def _proj_kernel(w_ref, p_ref, o_ref):
    # w_ref: (E, K)   projection matrix, resident in VMEM (constant index_map)
    # p_ref: (K, TN)  one lane-tile of flattened patches for one batch image
    # o_ref: (E, TN)  lane-dense output tile (patch index Ho*Wo on lanes)
    o_ref[...] = jnp.dot(
        w_ref[...], p_ref[...], preferred_element_type=jnp.float32
    ).astype(o_ref.dtype)


def patch_embed(x, weight, patch_size, *, compute_dtype=None, out_dtype=None):
    """PatchEmbed.forward: strided conv (kernel=stride=patch_size, no bias).

    x:      (B, C, H, W)
    weight: (E, C, p, p)   torch Conv2d OIHW layout
    returns (B, E, H//p, W//p)
    """
    B, C, H, W = x.shape
    E = weight.shape[0]
    p = int(patch_size)
    assert H % p == 0 and W % p == 0, f"Input ({H}x{W}) not divisible by patch {p}"
    Ho, Wo = H // p, W // p
    N = Ho * Wo              # patches per image -> output lane dim
    K = C * p * p            # contraction dim (kept whole, NOT padded to 128)

    cdtype = jnp.dtype(compute_dtype) if compute_dtype is not None else x.dtype
    odtype = jnp.dtype(out_dtype) if out_dtype is not None else x.dtype

    # --- patch flattening (wrapper-side, one layout pass on the input) -----
    # (B,C,Ho,p,Wo,p) view is free; the transpose puts K=(c,kh,kw) on sublanes
    # and N=(ho,wo) on lanes so the kernel output is already NCHW-ordered.
    patches_t = (
        jnp.transpose(x.reshape(B, C, Ho, p, Wo, p), (0, 1, 3, 5, 2, 4))
        .reshape(B, K, N)
        .astype(cdtype)
    )
    w_flat = weight.reshape(E, K).astype(cdtype)   # same (c,kh,kw) flatten order

    # --- tile sizing: double-buffered (K,TN) in + (E,TN) out under budget ---
    itemsize = jnp.dtype(cdtype).itemsize
    budget = 10 * 1024 * 1024                      # per-step pipeline budget
    per_col = 2 * (K + E) * itemsize               # bytes per lane column
    tn_cap = max(512, (budget // per_col) // 512 * 512)
    TN = N if N <= tn_cap else tn_cap              # multiple of 512, or full N
    grid_n = pl.cdiv(N, TN)
    # Guarantee >= 2 parallel grid steps when cheaply possible (v7x megacore).
    if B * grid_n == 1 and N >= 256:
        TN = ((N // 2 + 127) // 128) * 128
        grid_n = pl.cdiv(N, TN)

    out = pl.pallas_call(
        _proj_kernel,
        out_shape=jax.ShapeDtypeStruct((B, E, N), odtype),
        grid_spec=pltpu.PrefetchScalarGridSpec(
            num_scalar_prefetch=0,
            grid=(B, grid_n),
            in_specs=[
                pl.BlockSpec((E, K), lambda b, n: (0, 0)),            # whole weight
                pl.BlockSpec((None, K, TN), lambda b, n: (b, 0, n)),  # patch tile
            ],
            out_specs=pl.BlockSpec((None, E, TN), lambda b, n: (b, 0, n)),
        ),
        compiler_params=pltpu.CompilerParams(
            dimension_semantics=("parallel", "parallel"),
            vmem_limit_bytes=32 * 1024 * 1024,     # safe on v5e/v6e/v7x
        ),
    )(w_flat, patches_t)

    # (B, E, Ho*Wo) -> (B, E, Ho, Wo): free reshape, no transpose HBM pass.
    return out.reshape(B, E, Ho, Wo)


if __name__ == "__main__":
    key = jax.random.PRNGKey(0)
    kx, kw = jax.random.split(key)

    # Small shapes consistent with the module: 16x16 image, patch 4, 3 -> 96 ch.
    B, C, H, W = 2, 3, 16, 16
    patch_size = 4
    embed_dim = 96

    x = jax.random.normal(kx, (B, C, H, W), dtype=jnp.float32)
    w = 0.1 * jax.random.normal(
        kw, (embed_dim, C, patch_size, patch_size), dtype=jnp.float32
    )

    y = jax.block_until_ready(patch_embed(x, w, patch_size))

    # Pure-JAX reference: the same strided, bias-free convolution.
    ref = jax.lax.conv_general_dilated(
        x, w, window_strides=(patch_size, patch_size), padding="VALID",
        dimension_numbers=("NCHW", "OIHW", "NCHW"),
        precision=jax.lax.Precision.HIGHEST,
    )

    assert y.shape == (B, embed_dim, H // patch_size, W // patch_size), y.shape
    err = float(jnp.max(jnp.abs(y - ref)))
    assert err < 1e-3, err
    print("KERNEL_OK")
</pallas_src>

<mosaic_0001>
module attributes {stable_mosaic.version = 11 : i64} {
  func.func @_proj_kernel(%arg0: i32, %arg1: i32, %arg2: memref<96x48xf32, #tpu.memory_space<vmem>>, %arg3: memref<1x48x16xf32, #tpu.memory_space<vmem>>, %arg4: memref<1x96x16xf32, #tpu.memory_space<vmem>>) attributes {dimension_semantics = [#tpu.dimension_semantics<parallel>, #tpu.dimension_semantics<parallel>], iteration_bounds = array<i64: 2, 1>, scalar_prefetch = 0 : i64, scratch_operands = 0 : i64, tpu.core_type = #tpu.core_type<tc>, window_params = [{pipeline_mode = #tpu.pipeline_mode<synchronous>, transform_indices = @transform_0, window_bounds = array<i64: 96, 48>}, {transform_indices = @transform_1, window_bounds = array<i64: 1, 48, 16>}, {transform_indices = @transform_2, window_bounds = array<i64: 1, 96, 16>}]} {
    %c0 = arith.constant 0 : index
    %c0_0 = arith.constant 0 : index
    %0 = vector.load %arg2[%c0, %c0_0] : memref<96x48xf32, #tpu.memory_space<vmem>>, vector<96x48xf32>
    %c0_1 = arith.constant 0 : index
    %c0_2 = arith.constant 0 : index
    %c0_3 = arith.constant 0 : index
    %1 = vector.load %arg3[%c0_1, %c0_2, %c0_3] : memref<1x48x16xf32, #tpu.memory_space<vmem>>, vector<1x48x16xf32>
    %2 = vector.shape_cast %1 : vector<1x48x16xf32> to vector<48x16xf32>
    %cst = arith.constant dense<0.000000e+00> : vector<96x16xf32>
    %3 = tpu.matmul %0, %2, %cst {dimension_numbers = #tpu.dot_dimension_numbers<[1], [0], [0], [1], [0, 0, 1, 1], [], []>} : vector<96x48xf32>, vector<48x16xf32>, vector<96x16xf32> -> vector<96x16xf32>
    %c0_4 = arith.constant 0 : index
    %c0_5 = arith.constant 0 : index
    %c0_6 = arith.constant 0 : index
    %4 = vector.load %arg4[%c0_4, %c0_5, %c0_6] : memref<1x96x16xf32, #tpu.memory_space<vmem>>, vector<1x96x16xf32>
    %5 = vector.shape_cast %4 : vector<1x96x16xf32> to vector<96x16xf32>
    %6 = vector.shape_cast %3 : vector<96x16xf32> to vector<1x96x16xf32>
    tpu.vector_store %arg4[%c0_4, %c0_5, %c0_6], %6 {strides = array<i32>} : memref<1x96x16xf32, #tpu.memory_space<vmem>>, vector<1x96x16xf32>,
    return
  }
  func.func @transform_0(%arg0: i32, %arg1: i32) -> (i32, i32) {
    %c0_i32 = arith.constant 0 : i32
    %c0_i32_0 = arith.constant 0 : i32
    %c0_i32_1 = arith.constant 0 : i32
    return %c0_i32, %c0_i32_0 : i32, i32
  }
  func.func @transform_1(%arg0: i32, %arg1: i32) -> (i32, i32, i32) {
    %c0_i32 = arith.constant 0 : i32
    %c0_i32_0 = arith.constant 0 : i32
    return %arg0, %c0_i32, %arg1 : i32, i32, i32
  }
  func.func @transform_2(%arg0: i32, %arg1: i32) -> (i32, i32, i32) {
    %c0_i32 = arith.constant 0 : i32
    %c0_i32_0 = arith.constant 0 : i32
    return %arg0, %c0_i32, %arg1 : i32, i32, i32
  }
}

</mosaic_0001>

<llo_original>
// kernel: tpu_custom_call.1
$region0: #{tpu_custom_call.1}
  #allocation0 [shape = 'u32[]', space=smem, size = 0x4, offset = 0x4, fixed_abs, tag = 'smem constant byte address 0x4 - core index']
  #allocation1 [shape = 'u32[72,128]{1,0:T(1,128)}', space=vmem, size = 0x9000, scoped, tag = 'internal scratch']
  %s0 = inlined_call_operand.vmem [shape: f32[96,48], index: 0, kind: input, shape index: {}]
  %s1 = inlined_call_operand.vmem [shape: f32[2,48,16], index: 1, kind: input, shape index: {}]
  %s2 = inlined_call_operand.vmem [shape: f32[2,96,16], index: 2, kind: output, shape index: {}]
  %s3 = sld [smem:[#allocation0]]
  $region41: #{tpu_custom_call.1} parent=0
    _
  %s5 = ssub.s32 1, %s3
  %s6 = scalar_select 0, %s5, %s3
  loop: start=0, step=1, limit=4
  $region2: #{tpu_custom_call.1} parent=0 // loop_pre_header
    _
  $region3: #{tpu_custom_call.1} parent=0 // loop_header
    %s8 = sphi 0, %s12
    %p9 = scmp.ge.s32.totalorder %s8, 4
    %s15 = sphi 0, %s27
    %s16 = sphi 0, %s23
    %s17 = sphi 0, %s15
    %s18 = sphi 0, %s16
    %s19 = sphi 0, %s17
    %s20 = sphi 0, %s18
    %s28 = sphi 0, %s28
    %s30 = sphi 0, %s28
    %s31 = sphi 0, %s30
    %s45 = sphi 0, %s31
    %s53 = sphi 0, %s55
    %s56 = sphi 0, %s53
    %s57 = sphi 0, %s56
    %s73 = sphi 0, %s57
    %s81 = sphi 0, %s83
    %s84 = sphi 0, %s81
    %s85 = sphi 0, %s84
    %s101 = sphi 0, %s85
  $region4: #{tpu_custom_call.1} parent=0 // loop_header_branch
    %11 = sbr.rel (%p9) target = $region8
  $region5: #{tpu_custom_call.1} parent=0 // loop_body
    %s13 = ssub.s32 %s8, 1
    %s14 = ssub.s32 %s8, 2
    %s21 = sadd.s32 1, %s16
    %p22 = scmp.ge.s32.totalorder %s21, 1
    %s23 = scalar_select %p22, 0, %s21
    %s24 = sadd.s32 1, %s15
    %s25 = scalar_select %p22, %s24, %s15
    %p26 = scmp.ge.s32.totalorder %s25, 2
    %s27 = scalar_select %p26, 0, %s25
    %s29 = sadd.s32 %s28, 1
    %p32 = scmp.eq.s32.totalorder %s8, 1
    %p33 = scmp.ne.s32.totalorder %s28, %s30
    %p34 = scmp.eq.s32.totalorder %s8, 0
    %p35 = por %p33, %p34
    %p36 = scmp.ne.s32.totalorder %s28, %s30
    %p37 = scmp.eq.s32.totalorder %s13, 1
    %p38 = por %p36, %p37
    %p39 = scmp.ne.s32.totalorder %s30, %s31
    %p40 = scmp.eq.s32.totalorder %s13, 0
    %p41 = por %p39, %p40
    %p42 = scmp.ne.s32.totalorder %s30, %s31
    %p43 = scmp.eq.s32.totalorder %s14, 1
    %p44 = por %p42, %p43
    %p46 = scmp.ne.s32.totalorder %s31, %s45
    %p47 = scmp.eq.s32.totalorder %s14, 0
    %p48 = por %p46, %p47
    %s49 = ssub.s32 %s15, %s27
    %s50 = ssub.s32 %s16, %s23
    %s51 = sor.u32 %s49, %s50
    %p52 = scmp.eq.s32.totalorder %s51, 0
    %s54 = sadd.s32 %s53, 1
    %s55 = scalar_select %p52, %s53, %s54
    %p58 = pneg %p52
    %p59 = scmp.eq.s32.totalorder %s8, 1
    %p60 = por %p58, %p59
    %p61 = scmp.ne.s32.totalorder %s53, %s56
    %p62 = scmp.eq.s32.totalorder %s8, 0
    %p63 = por %p61, %p62
    %p64 = scmp.ne.s32.totalorder %s53, %s56
    %p65 = scmp.eq.s32.totalorder %s13, 1
    %p66 = por %p64, %p65
    %p67 = scmp.ne.s32.totalorder %s56, %s57
    %p68 = scmp.eq.s32.totalorder %s13, 0
    %p69 = por %p67, %p68
    %p70 = scmp.ne.s32.totalorder %s56, %s57
    %p71 = scmp.eq.s32.totalorder %s14, 1
    %p72 = por %p70, %p71
    %p74 = scmp.ne.s32.totalorder %s57, %s73
    %p75 = scmp.eq.s32.totalorder %s14, 0
    %p76 = por %p74, %p75
    %s77 = ssub.s32 %s15, %s27
    %s78 = ssub.s32 %s16, %s23
    %s79 = sor.u32 %s77, %s78
    %p80 = scmp.eq.s32.totalorder %s79, 0
    %s82 = sadd.s32 %s81, 1
    %s83 = scalar_select %p80, %s81, %s82
    %p86 = pneg %p80
    %p87 = scmp.eq.s32.totalorder %s8, 1
    %p88 = por %p86, %p87
    %p89 = scmp.ne.s32.totalorder %s81, %s84
    %p90 = scmp.eq.s32.totalorder %s8, 0
    %p91 = por %p89, %p90
    %p92 = scmp.ne.s32.totalorder %s81, %s84
    %p93 = scmp.eq.s32.totalorder %s13, 1
    %p94 = por %p92, %p93
    %p95 = scmp.ne.s32.totalorder %s84, %s85
    %p96 = scmp.eq.s32.totalorder %s13, 0
    %p97 = por %p95, %p96
    %p98 = scmp.ne.s32.totalorder %s84, %s85
    %p99 = scmp.eq.s32.totalorder %s14, 1
    %p100 = por %p98, %p99
    %p102 = scmp.ne.s32.totalorder %s85, %s101
    %p103 = scmp.eq.s32.totalorder %s14, 0
    %p104 = por %p102, %p103
    %p105 = scmp.le.s32.totalorder 1, %s8
    %p106 = scmp.lt.s32.totalorder %s8, 3
    %p107 = pnand %p105, %p106
    %p108 = pneg %p107
    // Predicated region
    $region9: #{tpu_custom_call.1} parent=5 // pred_check
      _
    $region10: #{tpu_custom_call.1} parent=5 // pred_check_branch
      %110 = sbr.rel (%p107) target = $region12
    $region11: #{tpu_custom_call.1} parent=5 // pred_region
      %s111 = ssub.s32 %s8, 1
      // Predicated region
      $region13: #{tpu_custom_call.1} parent=11 // pred_check
        %p112 = pneg %p41
      $region14: #{tpu_custom_call.1} parent=11 // pred_check_branch
        %114 = sbr.rel (%p112) target = $region16
      $region15: #{tpu_custom_call.1} parent=11 // pred_region
        _
      $region16: #{tpu_custom_call.1} parent=11 // pred_fallthru
        _
    $region12: #{tpu_custom_call.1} parent=5 // pred_fallthru
      _
    %p115 = scmp.lt.s32.totalorder %s8, 2
    // Predicated region
    $region17: #{tpu_custom_call.1} parent=5 // pred_check
      %p116 = pneg %p115
    $region18: #{tpu_custom_call.1} parent=5 // pred_check_branch
      %118 = sbr.rel (%p116) target = $region20
    $region19: #{tpu_custom_call.1} parent=5 // pred_region
      // Predicated region
      $region21: #{tpu_custom_call.1} parent=19 // pred_check
        %p119 = pneg %p63
      $region22: #{tpu_custom_call.1} parent=19 // pred_check_branch
        %121 = sbr.rel (%p119) target = $region24
      $region23: #{tpu_custom_call.1} parent=19 // pred_region
        %p122 = scmp.lt.s32.totalorder %s15, 1
        %s123 = scalar_select %p122, %s15, 1
        %p124 = scmp.lt.s32.totalorder %s16, 0
        %s125 = scalar_select %p124, %s16, 0
        %s126 = smul.addr %s123, 6
        %s127 = sadd.s32 %s125, %s126
        %s128 = smul.addr %s127, 8
        %s129 = scalar_lea.vmem %s1, %s128
      $region24: #{tpu_custom_call.1} parent=19 // pred_fallthru
        _
    $region20: #{tpu_custom_call.1} parent=5 // pred_fallthru
      _
    %p130 = scmp.le.s32.totalorder 1, %s8
    %p131 = scmp.lt.s32.totalorder %s8, 3
    %p132 = pnand %p130, %p131
    %p133 = pneg %p132
    // Predicated region
    $region25: #{tpu_custom_call.1} parent=5 // pred_check
      _
    $region26: #{tpu_custom_call.1} parent=5 // pred_check_branch
      %135 = sbr.rel (%p132) target = $region28
    $region27: #{tpu_custom_call.1} parent=5 // pred_region
      %s136 = ssub.s32 %s8, 1
      %p137 = pneg %p41
      %p138 = pneg %p38
      %p139 = scmp.lt.s32.totalorder %s17, 1
      %s140 = scalar_select %p139, %s17, 1
      %p141 = scmp.lt.s32.totalorder %s18, 0
      %s142 = scalar_select %p141, %s18, 0
      %s143 = smul.addr %s140, 6
      %s144 = sadd.s32 %s142, %s143
      %s145 = smul.addr %s144, 8
      %s146 = scalar_lea.vmem %s1, %s145
      %p147 = pneg %p69
      %p148 = pneg %p66
      %p149 = pneg %p97
      %p150 = pneg %p94
      %p151 = scmp.lt.s32.totalorder %s17, 1
      %s152 = scalar_select %p151, %s17, 1
      %p153 = scmp.lt.s32.totalorder %s18, 0
      %s154 = scalar_select %p153, %s18, 0
      %s155 = smul.addr %s152, 12
      %s156 = sadd.s32 %s154, %s155
      %s157 = smul.addr %s156, 8
      %s158 = scalar_lea.vmem %s2, %s157
      %p159 = scmp.lt.s32.totalorder %s17, 1
      %s160 = scalar_select %p159, %s17, 1
      %p161 = scmp.lt.s32.totalorder %s18, 0
      %s162 = scalar_select %p161, %s18, 0
      %s163 = smul.addr %s160, 6
      %s164 = sadd.s32 %s162, %s163
      %s165 = smul.addr %s164, 8
      %s166 = scalar_lea.vmem %s1, %s165
      %p167 = scmp.lt.s32.totalorder %s17, 1
      %s168 = scalar_select %p167, %s17, 1
      %p169 = scmp.lt.s32.totalorder %s18, 0
      %s170 = scalar_select %p169, %s18, 0
      %s171 = smul.addr %s168, 12
      %s172 = sadd.s32 %s170, %s171
      %s173 = smul.addr %s172, 8
      %s174 = scalar_lea.vmem %s2, %s173
      %v175 = vld [vmem:[%s0] sm:$0xff]
      %v176 = vld [vmem:[%s0 + $0x8] sm:$0xff]
      %v177 = vld [vmem:[%s0 + $0x10] sm:$0xff]
      %v178 = vld [vmem:[%s0 + $0x18] sm:$0xff]
      %v179 = vld [vmem:[%s0 + $0x20] sm:$0xff]
      %v180 = vld [vmem:[%s0 + $0x28] sm:$0xff]
      %v181 = vld [vmem:[%s0 + $0x30] sm:$0xff]
      %v182 = vld [vmem:[%s0 + $0x38] sm:$0xff]
      %v183 = vld [vmem:[%s0 + $0x40] sm:$0xff]
      %v184 = vld [vmem:[%s0 + $0x48] sm:$0xff]
      %v185 = vld [vmem:[%s0 + $0x50] sm:$0xff]
      %v186 = vld [vmem:[%s0 + $0x58] sm:$0xff]
      %v187 = vld [vmem:[%s166] sm:$0xff]
      %v188 = vld [vmem:[%s166 + $0x8] sm:$0xff]
      %v189 = vld [vmem:[%s166 + $0x10] sm:$0xff]
      %v190 = vld [vmem:[%s166 + $0x18] sm:$0xff]
      %v191 = vld [vmem:[%s166 + $0x20] sm:$0xff]
      %v192 = vld [vmem:[%s166 + $0x28] sm:$0xff]
      %vm193 = vcmask 392192
      %v195 = vsel %vm193, %v175, 0
      %v198 = vsel %vm193, %v176, 0
      %v201 = vsel %vm193, %v177, 0
      %v204 = vsel %vm193, %v178, 0
      %v207 = vsel %vm193, %v179, 0
      %v210 = vsel %vm193, %v180, 0
      %v213 = vsel %vm193, %v181, 0
      %v216 = vsel %vm193, %v182, 0
      %v219 = vsel %vm193, %v183, 0
      %v222 = vsel %vm193, %v184, 0
      %v225 = vsel %vm193, %v185, 0
      %v228 = vsel %vm193, %v186, 0
      %230 = vmatpush.msra.mxu0 0.0
      %231 = vmatpush.msra.mxu0 0.0
      %232 = vmatpush.msra.mxu0 0.0
      %233 = vmatpush.msra.mxu0 0.0
      %234 = vmatpush.msra.mxu0 0.0
      %235 = vmatpush.msra.mxu0 0.0
      %236 = vmatpush.msra.mxu0 0.0
      %237 = vmatpush.msra.mxu0 0.0
      %238 = vmatpush.msra.mxu0 0.0
      %239 = vmatpush.msra.mxu0 0.0
      %240 = vmatpush.msra.mxu0 %v192
      %241 = vmatpush.msra.mxu0 %v191
      %242 = vmatpush.msra.mxu0 %v190
      %243 = vmatpush.msra.mxu0 %v189
      %244 = vmatpush.msra.mxu0 %v188
      %245 = vmatpush.msra.mxu0 %v187
      %246 = vmatmul.f32.gmra.mxu0 %v195
      %v247 = vpop.f32.mrf.mxu0
      %v248 = vadd.f32 0.0, %v247
      %249 = vmatmul.f32.gmra.mxu0 %v198
      %v250 = vpop.f32.mrf.mxu0
      %v251 = vadd.f32 0.0, %v250
      %252 = vmatmul.f32.gmra.mxu0 %v201
      %v253 = vpop.f32.mrf.mxu0
      %v254 = vadd.f32 0.0, %v253
      %255 = vmatmul.f32.gmra.mxu0 %v204
      %v256 = vpop.f32.mrf.mxu0
      %v257 = vadd.f32 0.0, %v256
      %258 = vmatmul.f32.gmra.mxu0 %v207
      %v259 = vpop.f32.mrf.mxu0
      %v260 = vadd.f32 0.0, %v259
      %261 = vmatmul.f32.gmra.mxu0 %v210
      %v262 = vpop.f32.mrf.mxu0
      %v263 = vadd.f32 0.0, %v262
      %264 = vmatmul.f32.gmra.mxu0 %v213
      %v265 = vpop.f32.mrf.mxu0
      %v266 = vadd.f32 0.0, %v265
      %267 = vmatmul.f32.gmra.mxu0 %v216
      %v268 = vpop.f32.mrf.mxu0
      %v269 = vadd.f32 0.0, %v268
      %270 = vmatmul.f32.gmra.mxu0 %v219
      %v271 = vpop.f32.mrf.mxu0
      %v272 = vadd.f32 0.0, %v271
      %273 = vmatmul.f32.gmra.mxu0 %v222
      %v274 = vpop.f32.mrf.mxu0
      %v275 = vadd.f32 0.0, %v274
      %276 = vmatmul.f32.gmra.mxu0 %v225
      %v277 = vpop.f32.mrf.mxu0
      %v278 = vadd.f32 0.0, %v277
      %279 = vmatmul.f32.gmra.mxu0 %v228
      %v280 = vpop.f32.mrf.mxu0
      %v281 = vadd.f32 0.0, %v280
      %282 = vdwg.mxu0
      %vm283 = vcmask 130048
      %284 = vst.msk [vmem:[%s174] sm:$0xff] %vm283, %v248
      %285 = vst.msk [vmem:[%s174 + $0x8] sm:$0xff] %vm283, %v251
      %286 = vst.msk [vmem:[%s174 + $0x10] sm:$0xff] %vm283, %v254
      %287 = vst.msk [vmem:[%s174 + $0x18] sm:$0xff] %vm283, %v257
      %288 = vst.msk [vmem:[%s174 + $0x20] sm:$0xff] %vm283, %v260
      %289 = vst.msk [vmem:[%s174 + $0x28] sm:$0xff] %vm283, %v263
      %290 = vst.msk [vmem:[%s174 + $0x30] sm:$0xff] %vm283, %v266
      %291 = vst.msk [vmem:[%s174 + $0x38] sm:$0xff] %vm283, %v269
      %292 = vst.msk [vmem:[%s174 + $0x40] sm:$0xff] %vm283, %v272
      %293 = vst.msk [vmem:[%s174 + $0x48] sm:$0xff] %vm283, %v275
      %294 = vst.msk [vmem:[%s174 + $0x50] sm:$0xff] %vm283, %v278
      %295 = vst.msk [vmem:[%s174 + $0x58] sm:$0xff] %vm283, %v281
      %p296 = scmp.lt.s32.totalorder %s17, 1
      %s297 = scalar_select %p296, %s17, 1
      %p298 = scmp.lt.s32.totalorder %s18, 0
      %s299 = scalar_select %p298, %s18, 0
      %s300 = smul.addr %s297, 12
      %s301 = sadd.s32 %s299, %s300
      %s302 = smul.addr %s301, 8
      %s303 = scalar_lea.vmem %s2, %s302
      // Predicated region
      $region29: #{tpu_custom_call.1} parent=27 // pred_check
        %p304 = pneg %p94
      $region30: #{tpu_custom_call.1} parent=27 // pred_check_branch
        %306 = sbr.rel (%p304) target = $region32
      $region31: #{tpu_custom_call.1} parent=27 // pred_region
        _
      $region32: #{tpu_custom_call.1} parent=27 // pred_fallthru
        _
    $region28: #{tpu_custom_call.1} parent=5 // pred_fallthru
      _
    %p307 = scmp.le.s32.totalorder 2, %s8
    // Predicated region
    $region33: #{tpu_custom_call.1} parent=5 // pred_check
      %p308 = pneg %p307
    $region34: #{tpu_custom_call.1} parent=5 // pred_check_branch
      %310 = sbr.rel (%p308) target = $region36
    $region35: #{tpu_custom_call.1} parent=5 // pred_region
      %s311 = ssub.s32 %s8, 2
      // Predicated region
      $region37: #{tpu_custom_call.1} parent=35 // pred_check
        %p312 = pneg %p100
      $region38: #{tpu_custom_call.1} parent=35 // pred_check_branch
        %314 = sbr.rel (%p312) target = $region40
      $region39: #{tpu_custom_call.1} parent=35 // pred_region
        %p315 = scmp.lt.s32.totalorder %s19, 1
        %s316 = scalar_select %p315, %s19, 1
        %p317 = scmp.lt.s32.totalorder %s20, 0
        %s318 = scalar_select %p317, %s20, 0
        %s319 = smul.addr %s316, 12
        %s320 = sadd.s32 %s318, %s319
        %s321 = smul.addr %s320, 8
        %s322 = scalar_lea.vmem %s2, %s321
      $region40: #{tpu_custom_call.1} parent=35 // pred_fallthru
        _
    $region36: #{tpu_custom_call.1} parent=5 // pred_fallthru
      _
  $region6: #{tpu_custom_call.1} parent=0 // loop_footer
    %s12 = sadd.s32 1, %s8
  $region7: #{tpu_custom_call.1} parent=0 // loop_footer_branch
    %7 = sbr.rel target = $region3
  $region8: #{tpu_custom_call.1} parent=0 // loop_exit
    _

</llo_original>
